<compile_context>
chip_gen: v7x
topology: tpu7x:2x2x1
jax: 0.10.0
libtpu: 0.0.40
codegen_flags: <defaults>
</compile_context>

<pallas_src>
import jax
import jax.numpy as jnp
from jax.experimental import pallas as pl
from jax.experimental.pallas import tpu as pltpu

_LANE = 128


def _make_mlp_kernel(num_convs: int, use_bias: bool, compute_dtype=jnp.bfloat16):
    """Kernel: W_{L-1} @ relu(... relu(W_0 @ x (+b_0)) ...) (+b_{L-1}).

    x_ref: (C_in, tile_L), params: per-layer (C_out_l, C_in_l) [+ (C_out_l, 1)],
    o_ref: (C_out, tile_L).  Pixels on lanes -> lane-dense output stores.
    """

    def kernel(*refs):
        x_ref = refs[0]
        o_ref = refs[-1]
        params = refs[1:-1]

        h = x_ref[...].astype(compute_dtype)          # bf16 -> native MXU path
        idx = 0
        for i in range(num_convs):
            w = params[idx][...].astype(compute_dtype)   # (C_out_l, C_in_l)
            idx += 1
            acc = jnp.dot(w, h, preferred_element_type=jnp.float32)  # f32 acc
            if use_bias:
                b = params[idx][...]                      # (C_out_l, 1) column
                idx += 1
                acc = acc + b.astype(jnp.float32)         # lane broadcast (VPU)
            if i < num_convs - 1:
                # ReLU in the packed narrow dtype (half the vregs on v6e/v7x);
                # relu and round-to-bf16 commute, so numerics are unchanged.
                h = jnp.maximum(acc.astype(compute_dtype), 0)
            else:
                o_ref[...] = acc.astype(o_ref.dtype)

    return kernel


def _vmem_capacity_bytes():
    try:
        return int(getattr(pltpu.get_tpu_info(), "vmem_capacity_bytes", 64 << 20))
    except Exception:
        return 64 << 20  # v7x-safe fallback


def _choose_tile(L, N, c_in, c_out, c_max, itemsize, tile_l):
    """Lane-tile choice: big (mem-bound), VMEM-aware, >=2 grid steps, no over-pad."""
    tile_cap_pixels = pl.cdiv(L, _LANE) * _LANE          # don't over-pad tiny inputs
    # Double-buffered in/out blocks + in-kernel f32/bf16 intermediates per lane.
    per_lane = 2 * (c_in + c_out) * itemsize + 12 * c_max
    budget = min(20 << 20, _vmem_capacity_bytes() // 4)  # 16 MiB on v7x, 20 MiB else
    tile_cap_vmem = max(_LANE, (budget // per_lane) // _LANE * _LANE)
    tile = min(tile_l, tile_cap_pixels, tile_cap_vmem)
    tile = max(_LANE, (tile // _LANE) * _LANE)
    # Keep >= 2 total grid steps when the batch alone can't feed both v7x cores.
    if N < 2 and L > _LANE:
        half = max(_LANE, pl.cdiv(pl.cdiv(L, 2), _LANE) * _LANE)
        tile = min(tile, half)
    return tile


def sigma_mu_net_forward(x_nchw, weights, biases, *, tile_l=8192):
    """Fused 1x1-conv MLP forward.

    x_nchw : (N, C_in, H, W)
    weights: list of (C_out_l, C_in_l) matrices (PyTorch 1x1-conv weight, squeezed)
    biases : list of (C_out_l, 1) columns, or None if bias=False
    """
    use_bias = biases is not None
    num_convs = len(weights)
    N, C_in, H, W = x_nchw.shape
    C_out = weights[-1].shape[0]
    c_max = max(int(w.shape[0]) for w in weights)
    L = H * W

    # Pixels on lanes: contiguous reshape, no transpose, no extra HBM pass.
    x3d = x_nchw.reshape(N, C_in, L)
    itemsize = jnp.dtype(x_nchw.dtype).itemsize
    tile = _choose_tile(L, N, C_in, C_out, c_max, itemsize, tile_l)

    # No padding / slicing: last lane tile overhangs, out-of-bounds stores are
    # masked and overhang columns never influence valid columns.
    grid = (N, pl.cdiv(L, tile))

    in_specs = [pl.BlockSpec((None, C_in, tile), lambda n, i: (n, 0, i))]
    operands = [x3d]
    param_bytes = 0
    for li in range(num_convs):
        w = weights[li]
        in_specs.append(pl.BlockSpec(w.shape, lambda n, i: (0, 0)))  # VMEM-resident
        operands.append(w)
        param_bytes += int(w.size) * jnp.dtype(w.dtype).itemsize
        if use_bias:
            b = biases[li]
            in_specs.append(pl.BlockSpec(b.shape, lambda n, i: (0, 0)))
            operands.append(b)
            param_bytes += int(b.size) * jnp.dtype(b.dtype).itemsize

    out_spec = pl.BlockSpec((None, C_out, tile), lambda n, i: (n, 0, i))

    flops = 2 * N * L * sum(int(w.shape[0]) * int(w.shape[1]) for w in weights)
    bytes_accessed = N * (C_in + C_out) * L * itemsize + param_bytes
    cost = pl.CostEstimate(flops=flops, transcendentals=0,
                           bytes_accessed=bytes_accessed)

    # Explicit VMEM limit (don't rely on the scoped default, esp. on v7x).
    per_lane = 2 * (C_in + C_out) * itemsize + 12 * c_max
    est_vmem = per_lane * tile + 2 * param_bytes + (1 << 20)
    vmem_limit = int(min(max(2 * est_vmem, 16 << 20), 48 << 20))

    kernel = _make_mlp_kernel(num_convs, use_bias)

    y3d = pl.pallas_call(
        kernel,
        out_shape=jax.ShapeDtypeStruct((N, C_out, L), x_nchw.dtype),
        grid_spec=pltpu.PrefetchScalarGridSpec(
            num_scalar_prefetch=0,
            grid=grid,
            in_specs=in_specs,
            out_specs=out_spec,
        ),
        compiler_params=pltpu.CompilerParams(
            dimension_semantics=("parallel", "parallel"),
            vmem_limit_bytes=vmem_limit,
        ),
        cost_estimate=cost,
    )(*operands)

    # Output already NCHW-contiguous; pure metadata reshape, no copy.
    return y3d.reshape(N, C_out, H, W)


def init_params(key, in_ch, out_ch, mid_ch, layers, bias):
    """Deterministic synthetic init matching Sigma_mu_Net's 1x1-conv stack.

    Conv l: weight (C_out_l, C_in_l), bias (C_out_l, 1).
    # TODO(synk): original module calls init_weights(...) (not shown in spec);
    # synthetic He-style init is used here instead.
    """
    dims = [in_ch] + [mid_ch] * (layers - 1) + [out_ch]
    weights, biases = [], [] if bias else None
    for li in range(layers):
        key, wk, bk = jax.random.split(key, 3)
        fan_in = dims[li]
        w = (jax.random.normal(wk, (dims[li + 1], dims[li]), jnp.float32)
             * (2.0 / fan_in) ** 0.5)
        weights.append(w)
        if bias:
            b = jax.random.normal(bk, (dims[li + 1], 1), jnp.float32) * 0.01
            biases.append(b)
    return weights, biases


def reference_forward(x_nchw, weights, biases, compute_dtype=jnp.bfloat16):
    """Pure-JAX reference with the same bf16-operand / f32-accumulate numerics."""
    N, C, H, W = x_nchw.shape
    h = x_nchw.reshape(N, C, H * W).astype(compute_dtype)
    out = None
    for li, w in enumerate(weights):
        acc = jnp.einsum('oc,ncl->nol', w.astype(compute_dtype), h,
                         preferred_element_type=jnp.float32)
        if biases is not None:
            acc = acc + biases[li][None].astype(jnp.float32)
        if li < len(weights) - 1:
            h = jnp.maximum(acc.astype(compute_dtype), 0)
        else:
            out = acc
    C_out = weights[-1].shape[0]
    return out.reshape(N, C_out, H, W).astype(x_nchw.dtype)


if __name__ == "__main__":
    # Small shapes consistent with the module (1x1 convs ignore kernel_size).
    in_ch, out_ch, mid_ch, layers, bias = 4, 4, 32, 4, True
    N, H, W = 2, 16, 16

    key = jax.random.PRNGKey(0)
    key, xk = jax.random.split(key)
    x = jax.random.normal(xk, (N, in_ch, H, W), jnp.float32)

    weights, biases = init_params(key, in_ch, out_ch, mid_ch, layers, bias)

    y = sigma_mu_net_forward(x, weights, biases)
    y = jax.block_until_ready(y)
    assert y.shape == (N, out_ch, H, W)

    y_ref = reference_forward(x, weights, biases)
    err = float(jnp.max(jnp.abs(y.astype(jnp.float32) - y_ref.astype(jnp.float32))))
    scale = float(jnp.max(jnp.abs(y_ref.astype(jnp.float32)))) + 1e-6
    assert err <= 5e-2 * scale + 1e-3, f"mismatch vs reference: err={err}, scale={scale}"

    print("KERNEL_OK")
</pallas_src>

<mosaic_0001>
module attributes {stable_mosaic.version = 11 : i64} {
  func.func @kernel(%arg0: i32, %arg1: i32, %arg2: memref<1x4x256xf32, #tpu.memory_space<vmem>>, %arg3: memref<32x4xf32, #tpu.memory_space<vmem>>, %arg4: memref<32x1xf32, #tpu.memory_space<vmem>>, %arg5: memref<32x32xf32, #tpu.memory_space<vmem>>, %arg6: memref<32x1xf32, #tpu.memory_space<vmem>>, %arg7: memref<32x32xf32, #tpu.memory_space<vmem>>, %arg8: memref<32x1xf32, #tpu.memory_space<vmem>>, %arg9: memref<4x32xf32, #tpu.memory_space<vmem>>, %arg10: memref<4x1xf32, #tpu.memory_space<vmem>>, %arg11: memref<1x4x256xf32, #tpu.memory_space<vmem>>) attributes {dimension_semantics = [#tpu.dimension_semantics<parallel>, #tpu.dimension_semantics<parallel>], iteration_bounds = array<i64: 2, 1>, scalar_prefetch = 0 : i64, scratch_operands = 0 : i64, tpu.core_type = #tpu.core_type<tc>, window_params = [{transform_indices = @transform_0, window_bounds = array<i64: 1, 4, 256>}, {pipeline_mode = #tpu.pipeline_mode<synchronous>, transform_indices = @transform_1, window_bounds = array<i64: 32, 4>}, {pipeline_mode = #tpu.pipeline_mode<synchronous>, transform_indices = @transform_2, window_bounds = array<i64: 32, 1>}, {pipeline_mode = #tpu.pipeline_mode<synchronous>, transform_indices = @transform_3, window_bounds = array<i64: 32, 32>}, {pipeline_mode = #tpu.pipeline_mode<synchronous>, transform_indices = @transform_4, window_bounds = array<i64: 32, 1>}, {pipeline_mode = #tpu.pipeline_mode<synchronous>, transform_indices = @transform_5, window_bounds = array<i64: 32, 32>}, {pipeline_mode = #tpu.pipeline_mode<synchronous>, transform_indices = @transform_6, window_bounds = array<i64: 32, 1>}, {pipeline_mode = #tpu.pipeline_mode<synchronous>, transform_indices = @transform_7, window_bounds = array<i64: 4, 32>}, {pipeline_mode = #tpu.pipeline_mode<synchronous>, transform_indices = @transform_8, window_bounds = array<i64: 4, 1>}, {transform_indices = @transform_9, window_bounds = array<i64: 1, 4, 256>}]} {
    %c0 = arith.constant 0 : index
    %c0_0 = arith.constant 0 : index
    %c0_1 = arith.constant 0 : index
    %0 = vector.load %arg2[%c0, %c0_0, %c0_1] : memref<1x4x256xf32, #tpu.memory_space<vmem>>, vector<1x4x256xf32>
    %1 = vector.shape_cast %0 : vector<1x4x256xf32> to vector<4x256xf32>
    %2 = arith.truncf %1 : vector<4x256xf32> to vector<4x256xbf16>
    %c0_2 = arith.constant 0 : index
    %c0_3 = arith.constant 0 : index
    %3 = vector.load %arg3[%c0_2, %c0_3] : memref<32x4xf32, #tpu.memory_space<vmem>>, vector<32x4xf32>
    %4 = arith.truncf %3 : vector<32x4xf32> to vector<32x4xbf16>
    %cst = arith.constant dense<0.000000e+00> : vector<32x256xf32>
    %5 = tpu.matmul %4, %2, %cst {dimension_numbers = #tpu.dot_dimension_numbers<[1], [0], [0], [1], [0, 0, 1, 1], [], []>} : vector<32x4xbf16>, vector<4x256xbf16>, vector<32x256xf32> -> vector<32x256xf32>
    %c0_4 = arith.constant 0 : index
    %c0_5 = arith.constant 0 : index
    %6 = vector.load %arg4[%c0_4, %c0_5] : memref<32x1xf32, #tpu.memory_space<vmem>>, vector<32x1xf32>
    %7 = vector.broadcast %6 : vector<32x1xf32> to vector<32x256xf32>
    %8 = arith.addf %5, %7 : vector<32x256xf32>
    %9 = arith.truncf %8 : vector<32x256xf32> to vector<32x256xbf16>
    %cst_6 = arith.constant 0.000000e+00 : bf16
    %10 = vector.broadcast %cst_6 : bf16 to vector<32x256xbf16>
    %11 = arith.maximumf %9, %10 : vector<32x256xbf16>
    %c0_7 = arith.constant 0 : index
    %c0_8 = arith.constant 0 : index
    %12 = vector.load %arg5[%c0_7, %c0_8] : memref<32x32xf32, #tpu.memory_space<vmem>>, vector<32x32xf32>
    %13 = arith.truncf %12 : vector<32x32xf32> to vector<32x32xbf16>
    %cst_9 = arith.constant dense<0.000000e+00> : vector<32x256xf32>
    %14 = tpu.matmul %13, %11, %cst_9 {dimension_numbers = #tpu.dot_dimension_numbers<[1], [0], [0], [1], [0, 0, 1, 1], [], []>} : vector<32x32xbf16>, vector<32x256xbf16>, vector<32x256xf32> -> vector<32x256xf32>
    %c0_10 = arith.constant 0 : index
    %c0_11 = arith.constant 0 : index
    %15 = vector.load %arg6[%c0_10, %c0_11] : memref<32x1xf32, #tpu.memory_space<vmem>>, vector<32x1xf32>
    %16 = vector.broadcast %15 : vector<32x1xf32> to vector<32x256xf32>
    %17 = arith.addf %14, %16 : vector<32x256xf32>
    %18 = arith.truncf %17 : vector<32x256xf32> to vector<32x256xbf16>
    %cst_12 = arith.constant 0.000000e+00 : bf16
    %19 = vector.broadcast %cst_12 : bf16 to vector<32x256xbf16>
    %20 = arith.maximumf %18, %19 : vector<32x256xbf16>
    %c0_13 = arith.constant 0 : index
    %c0_14 = arith.constant 0 : index
    %21 = vector.load %arg7[%c0_13, %c0_14] : memref<32x32xf32, #tpu.memory_space<vmem>>, vector<32x32xf32>
    %22 = arith.truncf %21 : vector<32x32xf32> to vector<32x32xbf16>
    %cst_15 = arith.constant dense<0.000000e+00> : vector<32x256xf32>
    %23 = tpu.matmul %22, %20, %cst_15 {dimension_numbers = #tpu.dot_dimension_numbers<[1], [0], [0], [1], [0, 0, 1, 1], [], []>} : vector<32x32xbf16>, vector<32x256xbf16>, vector<32x256xf32> -> vector<32x256xf32>
    %c0_16 = arith.constant 0 : index
    %c0_17 = arith.constant 0 : index
    %24 = vector.load %arg8[%c0_16, %c0_17] : memref<32x1xf32, #tpu.memory_space<vmem>>, vector<32x1xf32>
    %25 = vector.broadcast %24 : vector<32x1xf32> to vector<32x256xf32>
    %26 = arith.addf %23, %25 : vector<32x256xf32>
    %27 = arith.truncf %26 : vector<32x256xf32> to vector<32x256xbf16>
    %cst_18 = arith.constant 0.000000e+00 : bf16
    %28 = vector.broadcast %cst_18 : bf16 to vector<32x256xbf16>
    %29 = arith.maximumf %27, %28 : vector<32x256xbf16>
    %c0_19 = arith.constant 0 : index
    %c0_20 = arith.constant 0 : index
    %30 = vector.load %arg9[%c0_19, %c0_20] : memref<4x32xf32, #tpu.memory_space<vmem>>, vector<4x32xf32>
    %31 = arith.truncf %30 : vector<4x32xf32> to vector<4x32xbf16>
    %cst_21 = arith.constant dense<0.000000e+00> : vector<4x256xf32>
    %32 = tpu.matmul %31, %29, %cst_21 {dimension_numbers = #tpu.dot_dimension_numbers<[1], [0], [0], [1], [0, 0, 1, 1], [], []>} : vector<4x32xbf16>, vector<32x256xbf16>, vector<4x256xf32> -> vector<4x256xf32>
    %c0_22 = arith.constant 0 : index
    %c0_23 = arith.constant 0 : index
    %33 = vector.load %arg10[%c0_22, %c0_23] : memref<4x1xf32, #tpu.memory_space<vmem>>, vector<4x1xf32>
    %34 = vector.broadcast %33 : vector<4x1xf32> to vector<4x256xf32>
    %35 = arith.addf %32, %34 : vector<4x256xf32>
    %c0_24 = arith.constant 0 : index
    %c0_25 = arith.constant 0 : index
    %c0_26 = arith.constant 0 : index
    %36 = vector.load %arg11[%c0_24, %c0_25, %c0_26] : memref<1x4x256xf32, #tpu.memory_space<vmem>>, vector<1x4x256xf32>
    %37 = vector.shape_cast %36 : vector<1x4x256xf32> to vector<4x256xf32>
    %38 = vector.shape_cast %35 : vector<4x256xf32> to vector<1x4x256xf32>
    tpu.vector_store %arg11[%c0_24, %c0_25, %c0_26], %38 {strides = array<i32>} : memref<1x4x256xf32, #tpu.memory_space<vmem>>, vector<1x4x256xf32>,
    return
  }
  func.func @transform_0(%arg0: i32, %arg1: i32) -> (i32, i32, i32) {
    %c0_i32 = arith.constant 0 : i32
    %c0_i32_0 = arith.constant 0 : i32
    return %arg0, %c0_i32, %arg1 : i32, i32, i32
  }
  func.func @transform_1(%arg0: i32, %arg1: i32) -> (i32, i32) {
    %c0_i32 = arith.constant 0 : i32
    %c0_i32_0 = arith.constant 0 : i32
    %c0_i32_1 = arith.constant 0 : i32
    return %c0_i32, %c0_i32_0 : i32, i32
  }
  func.func @transform_2(%arg0: i32, %arg1: i32) -> (i32, i32) {
    %c0_i32 = arith.constant 0 : i32
    %c0_i32_0 = arith.constant 0 : i32
    %c0_i32_1 = arith.constant 0 : i32
    return %c0_i32, %c0_i32_0 : i32, i32
  }
  func.func @transform_3(%arg0: i32, %arg1: i32) -> (i32, i32) {
    %c0_i32 = arith.constant 0 : i32
    %c0_i32_0 = arith.constant 0 : i32
    %c0_i32_1 = arith.constant 0 : i32
    return %c0_i32, %c0_i32_0 : i32, i32
  }
  func.func @transform_4(%arg0: i32, %arg1: i32) -> (i32, i32) {
    %c0_i32 = arith.constant 0 : i32
    %c0_i32_0 = arith.constant 0 : i32
    %c0_i32_1 = arith.constant 0 : i32
    return %c0_i32, %c0_i32_0 : i32, i32
  }
  func.func @transform_5(%arg0: i32, %arg1: i32) -> (i32, i32) {
    %c0_i32 = arith.constant 0 : i32
    %c0_i32_0 = arith.constant 0 : i32
    %c0_i32_1 = arith.constant 0 : i32
    return %c0_i32, %c0_i32_0 : i32, i32
  }
  func.func @transform_6(%arg0: i32, %arg1: i32) -> (i32, i32) {
    %c0_i32 = arith.constant 0 : i32
    %c0_i32_0 = arith.constant 0 : i32
    %c0_i32_1 = arith.constant 0 : i32
    return %c0_i32, %c0_i32_0 : i32, i32
  }
  func.func @transform_7(%arg0: i32, %arg1: i32) -> (i32, i32) {
    %c0_i32 = arith.constant 0 : i32
    %c0_i32_0 = arith.constant 0 : i32
    %c0_i32_1 = arith.constant 0 : i32
    return %c0_i32, %c0_i32_0 : i32, i32
  }
  func.func @transform_8(%arg0: i32, %arg1: i32) -> (i32, i32) {
    %c0_i32 = arith.constant 0 : i32
    %c0_i32_0 = arith.constant 0 : i32
    %c0_i32_1 = arith.constant 0 : i32
    return %c0_i32, %c0_i32_0 : i32, i32
  }
  func.func @transform_9(%arg0: i32, %arg1: i32) -> (i32, i32, i32) {
    %c0_i32 = arith.constant 0 : i32
    %c0_i32_0 = arith.constant 0 : i32
    return %arg0, %c0_i32, %arg1 : i32, i32, i32
  }
}

</mosaic_0001>

<llo_original>
// kernel: tpu_custom_call.1
$region0: #{tpu_custom_call.1}
  #allocation0 [shape = 'u32[]', space=smem, size = 0x4, offset = 0x4, fixed_abs, tag = 'smem constant byte address 0x4 - core index']
  #allocation1 [shape = 'u32[144,128]{1,0:T(1,128)}', space=vmem, size = 0x12000, scoped, tag = 'internal scratch']
  %s0 = inlined_call_operand.vmem [shape: f32[2,4,256], index: 0, kind: input, shape index: {}]
  %s1 = inlined_call_operand.vmem [shape: f32[32,4], index: 1, kind: input, shape index: {}]
  %s2 = inlined_call_operand.vmem [shape: f32[32,1], index: 2, kind: input, shape index: {}]
  %s3 = inlined_call_operand.vmem [shape: f32[32,32], index: 3, kind: input, shape index: {}]
  %s4 = inlined_call_operand.vmem [shape: f32[32,1], index: 4, kind: input, shape index: {}]
  %s5 = inlined_call_operand.vmem [shape: f32[32,32], index: 5, kind: input, shape index: {}]
  %s6 = inlined_call_operand.vmem [shape: f32[32,1], index: 6, kind: input, shape index: {}]
  %s7 = inlined_call_operand.vmem [shape: f32[4,32], index: 7, kind: input, shape index: {}]
  %s8 = inlined_call_operand.vmem [shape: f32[4,1], index: 8, kind: input, shape index: {}]
  %s9 = inlined_call_operand.hbm [shape: f32[2,4,256], index: 9, kind: output, shape index: {}]
  %s10 = sld [smem:[#allocation0]]
  $region69: #{tpu_custom_call.1} parent=0
    _
  %s12 = ssub.s32 1, %s10
  %s13 = scalar_select 0, %s12, %s10
  $region1: #{tpu_custom_call.1} parent=0
    #allocation2 [shape = 'u8[8192]{0}', space=vmem, size = 0x2000, scoped, tag = 'output window, operand 0']
    #allocation3 [shape = 's32[2]{0}', space=sflag, size = 0x8, scoped, tag = 'scoped memory for tpu_custom_call.1']
    %14 = vsyncpa [#allocation3], 0
    %s15 = scalar_lea.sflag [#allocation3], 1
    %16 = vsyncpa %s15, 0
    loop: start=0, step=1, limit=4
    $region2: #{tpu_custom_call.1} parent=1 // loop_pre_header
      _
    $region3: #{tpu_custom_call.1} parent=1 // loop_header
      %s18 = sphi 0, %s22
      %p19 = scmp.ge.s32.totalorder %s18, 4
      %s25 = sphi 0, %s37
      %s26 = sphi 0, %s33
      %s27 = sphi 0, %s25
      %s28 = sphi 0, %s26
      %s29 = sphi 0, %s27
      %s30 = sphi 0, %s28
      %s42 = sphi 0, %s44
      %s45 = sphi 0, %s42
      %s46 = sphi 0, %s45
      %s62 = sphi 0, %s46
      %s66 = sphi 0, %s66
      %s68 = sphi 0, %s66
      %s69 = sphi 0, %s68
      %s83 = sphi 0, %s69
      %s87 = sphi 0, %s87
      %s89 = sphi 0, %s87
      %s90 = sphi 0, %s89
      %s104 = sphi 0, %s90
      %s108 = sphi 0, %s108
      %s110 = sphi 0, %s108
      %s111 = sphi 0, %s110
      %s125 = sphi 0, %s111
      %s129 = sphi 0, %s129
      %s131 = sphi 0, %s129
      %s132 = sphi 0, %s131
      %s146 = sphi 0, %s132
      %s150 = sphi 0, %s150
      %s152 = sphi 0, %s150
      %s153 = sphi 0, %s152
      %s167 = sphi 0, %s153
      %s171 = sphi 0, %s171
      %s173 = sphi 0, %s171
      %s174 = sphi 0, %s173
      %s188 = sphi 0, %s174
      %s192 = sphi 0, %s192
      %s194 = sphi 0, %s192
      %s195 = sphi 0, %s194
      %s209 = sphi 0, %s195
      %s213 = sphi 0, %s213
      %s215 = sphi 0, %s213
      %s216 = sphi 0, %s215
      %s230 = sphi 0, %s216
      %s238 = sphi 0, %s240
      %s241 = sphi 0, %s238
      %s242 = sphi 0, %s241
      %s258 = sphi 0, %s242
    $region4: #{tpu_custom_call.1} parent=1 // loop_header_branch
      %21 = sbr.rel (%p19) target = $region8
    $region5: #{tpu_custom_call.1} parent=1 // loop_body
      %s23 = ssub.s32 %s18, 1
      %s24 = ssub.s32 %s18, 2
      %s31 = sadd.s32 1, %s26
      %p32 = scmp.ge.s32.totalorder %s31, 1
      %s33 = scalar_select %p32, 0, %s31
      %s34 = sadd.s32 1, %s25
      %s35 = scalar_select %p32, %s34, %s25
      %p36 = scmp.ge.s32.totalorder %s35, 2
      %s37 = scalar_select %p36, 0, %s35
      %s38 = ssub.s32 %s25, %s37
      %s39 = ssub.s32 %s26, %s33
      %s40 = sor.u32 %s38, %s39
      %p41 = scmp.eq.s32.totalorder %s40, 0
      %s43 = sadd.s32 %s42, 1
      %s44 = scalar_select %p41, %s42, %s43
      %p47 = pneg %p41
      %p48 = scmp.eq.s32.totalorder %s18, 1
      %p49 = por %p47, %p48
      %p50 = scmp.ne.s32.totalorder %s42, %s45
      %p51 = scmp.eq.s32.totalorder %s18, 0
      %p52 = por %p50, %p51
      %p53 = scmp.ne.s32.totalorder %s42, %s45
      %p54 = scmp.eq.s32.totalorder %s23, 1
      %p55 = por %p53, %p54
      %p56 = scmp.ne.s32.totalorder %s45, %s46
      %p57 = scmp.eq.s32.totalorder %s23, 0
      %p58 = por %p56, %p57
      %p59 = scmp.ne.s32.totalorder %s45, %s46
      %p60 = scmp.eq.s32.totalorder %s24, 1
      %p61 = por %p59, %p60
      %p63 = scmp.ne.s32.totalorder %s46, %s62
      %p64 = scmp.eq.s32.totalorder %s24, 0
      %p65 = por %p63, %p64
      %s67 = sadd.s32 %s66, 1
      %p70 = scmp.eq.s32.totalorder %s18, 1
      %p71 = scmp.ne.s32.totalorder %s66, %s68
      %p72 = scmp.eq.s32.totalorder %s18, 0
      %p73 = por %p71, %p72
      %p74 = scmp.ne.s32.totalorder %s66, %s68
      %p75 = scmp.eq.s32.totalorder %s23, 1
      %p76 = por %p74, %p75
      %p77 = scmp.ne.s32.totalorder %s68, %s69
      %p78 = scmp.eq.s32.totalorder %s23, 0
      %p79 = por %p77, %p78
      %p80 = scmp.ne.s32.totalorder %s68, %s69
      %p81 = scmp.eq.s32.totalorder %s24, 1
      %p82 = por %p80, %p81
      %p84 = scmp.ne.s32.totalorder %s69, %s83
      %p85 = scmp.eq.s32.totalorder %s24, 0
      %p86 = por %p84, %p85
      %s88 = sadd.s32 %s87, 1
      %p91 = scmp.eq.s32.totalorder %s18, 1
      %p92 = scmp.ne.s32.totalorder %s87, %s89
      %p93 = scmp.eq.s32.totalorder %s18, 0
      %p94 = por %p92, %p93
      %p95 = scmp.ne.s32.totalorder %s87, %s89
      %p96 = scmp.eq.s32.totalorder %s23, 1
      %p97 = por %p95, %p96
      %p98 = scmp.ne.s32.totalorder %s89, %s90
      %p99 = scmp.eq.s32.totalorder %s23, 0
      %p100 = por %p98, %p99
      %p101 = scmp.ne.s32.totalorder %s89, %s90
      %p102 = scmp.eq.s32.totalorder %s24, 1
      %p103 = por %p101, %p102
      %p105 = scmp.ne.s32.totalorder %s90, %s104
      %p106 = scmp.eq.s32.totalorder %s24, 0
      %p107 = por %p105, %p106
      %s109 = sadd.s32 %s108, 1
      %p112 = scmp.eq.s32.totalorder %s18, 1
      %p113 = scmp.ne.s32.totalorder %s108, %s110
      %p114 = scmp.eq.s32.totalorder %s18, 0
      %p115 = por %p113, %p114
      %p116 = scmp.ne.s32.totalorder %s108, %s110
      %p117 = scmp.eq.s32.totalorder %s23, 1
      %p118 = por %p116, %p117
      %p119 = scmp.ne.s32.totalorder %s110, %s111
      %p120 = scmp.eq.s32.totalorder %s23, 0
      %p121 = por %p119, %p120
      %p122 = scmp.ne.s32.totalorder %s110, %s111
      %p123 = scmp.eq.s32.totalorder %s24, 1
      %p124 = por %p122, %p123
      %p126 = scmp.ne.s32.totalorder %s111, %s125
      %p127 = scmp.eq.s32.totalorder %s24, 0
      %p128 = por %p126, %p127
      %s130 = sadd.s32 %s129, 1
      %p133 = scmp.eq.s32.totalorder %s18, 1
      %p134 = scmp.ne.s32.totalorder %s129, %s131
      %p135 = scmp.eq.s32.totalorder %s18, 0
      %p136 = por %p134, %p135
      %p137 = scmp.ne.s32.totalorder %s129, %s131
      %p138 = scmp.eq.s32.totalorder %s23, 1
      %p139 = por %p137, %p138
      %p140 = scmp.ne.s32.totalorder %s131, %s132
      %p141 = scmp.eq.s32.totalorder %s23, 0
      %p142 = por %p140, %p141
      %p143 = scmp.ne.s32.totalorder %s131, %s132
      %p144 = scmp.eq.s32.totalorder %s24, 1
      %p145 = por %p143, %p144
      %p147 = scmp.ne.s32.totalorder %s132, %s146
      %p148 = scmp.eq.s32.totalorder %s24, 0
      %p149 = por %p147, %p148
      %s151 = sadd.s32 %s150, 1
      %p154 = scmp.eq.s32.totalorder %s18, 1
      %p155 = scmp.ne.s32.totalorder %s150, %s152
      %p156 = scmp.eq.s32.totalorder %s18, 0
      %p157 = por %p155, %p156
      %p158 = scmp.ne.s32.totalorder %s150, %s152
      %p159 = scmp.eq.s32.totalorder %s23, 1
      %p160 = por %p158, %p159
      %p161 = scmp.ne.s32.totalorder %s152, %s153
      %p162 = scmp.eq.s32.totalorder %s23, 0
      %p163 = por %p161, %p162
      %p164 = scmp.ne.s32.totalorder %s152, %s153
      %p165 = scmp.eq.s32.totalorder %s24, 1
      %p166 = por %p164, %p165
      %p168 = scmp.ne.s32.totalorder %s153, %s167
      %p169 = scmp.eq.s32.totalorder %s24, 0
      %p170 = por %p168, %p169
      %s172 = sadd.s32 %s171, 1
      %p175 = scmp.eq.s32.totalorder %s18, 1
      %p176 = scmp.ne.s32.totalorder %s171, %s173
      %p177 = scmp.eq.s32.totalorder %s18, 0
      %p178 = por %p176, %p177
      %p179 = scmp.ne.s32.totalorder %s171, %s173
      %p180 = scmp.eq.s32.totalorder %s23, 1
      %p181 = por %p179, %p180
      %p182 = scmp.ne.s32.totalorder %s173, %s174
      %p183 = scmp.eq.s32.totalorder %s23, 0
      %p184 = por %p182, %p183
      %p185 = scmp.ne.s32.totalorder %s173, %s174
      %p186 = scmp.eq.s32.totalorder %s24, 1
      %p187 = por %p185, %p186
      %p189 = scmp.ne.s32.totalorder %s174, %s188
      %p190 = scmp.eq.s32.totalorder %s24, 0
      %p191 = por %p189, %p190
      %s193 = sadd.s32 %s192, 1
      %p196 = scmp.eq.s32.totalorder %s18, 1
      %p197 = scmp.ne.s32.totalorder %s192, %s194
      %p198 = scmp.eq.s32.totalorder %s18, 0
      %p199 = por %p197, %p198
      %p200 = scmp.ne.s32.totalorder %s192, %s194
      %p201 = scmp.eq.s32.totalorder %s23, 1
      %p202 = por %p200, %p201
      %p203 = scmp.ne.s32.totalorder %s194, %s195
      %p204 = scmp.eq.s32.totalorder %s23, 0
      %p205 = por %p203, %p204
      %p206 = scmp.ne.s32.totalorder %s194, %s195
      %p207 = scmp.eq.s32.totalorder %s24, 1
      %p208 = por %p206, %p207
      %p210 = scmp.ne.s32.totalorder %s195, %s209
      %p211 = scmp.eq.s32.totalorder %s24, 0
      %p212 = por %p210, %p211
      %s214 = sadd.s32 %s213, 1
      %p217 = scmp.eq.s32.totalorder %s18, 1
      %p218 = scmp.ne.s32.totalorder %s213, %s215
      %p219 = scmp.eq.s32.totalorder %s18, 0
      %p220 = por %p218, %p219
      %p221 = scmp.ne.s32.totalorder %s213, %s215
      %p222 = scmp.eq.s32.totalorder %s23, 1
      %p223 = por %p221, %p222
      %p224 = scmp.ne.s32.totalorder %s215, %s216
      %p225 = scmp.eq.s32.totalorder %s23, 0
      %p226 = por %p224, %p225
      %p227 = scmp.ne.s32.totalorder %s215, %s216
      %p228 = scmp.eq.s32.totalorder %s24, 1
      %p229 = por %p227, %p228
      %p231 = scmp.ne.s32.totalorder %s216, %s230
      %p232 = scmp.eq.s32.totalorder %s24, 0
      %p233 = por %p231, %p232
      %s234 = ssub.s32 %s25, %s37
      %s235 = ssub.s32 %s26, %s33
      %s236 = sor.u32 %s234, %s235
      %p237 = scmp.eq.s32.totalorder %s236, 0
      %s239 = sadd.s32 %s238, 1
      %s240 = scalar_select %p237, %s238, %s239
      %p243 = pneg %p237
      %p244 = scmp.eq.s32.totalorder %s18, 1
      %p245 = por %p243, %p244
      %p246 = scmp.ne.s32.totalorder %s238, %s241
      %p247 = scmp.eq.s32.totalorder %s18, 0
      %p248 = por %p246, %p247
      %p249 = scmp.ne.s32.totalorder %s238, %s241
      %p250 = scmp.eq.s32.totalorder %s23, 1
      %p251 = por %p249, %p250
      %p252 = scmp.ne.s32.totalorder %s241, %s242
      %p253 = scmp.eq.s32.totalorder %s23, 0
      %p254 = por %p252, %p253
      %p255 = scmp.ne.s32.totalorder %s241, %s242
      %p256 = scmp.eq.s32.totalorder %s24, 1
      %p257 = por %p255, %p256
      %p259 = scmp.ne.s32.totalorder %s242, %s258
      %p260 = scmp.eq.s32.totalorder %s24, 0
      %p261 = por %p259, %p260
      %p262 = scmp.le.s32.totalorder 1, %s18
      %p263 = scmp.lt.s32.totalorder %s18, 3
      %p264 = pnand %p262, %p263
      %p265 = pneg %p264
      // Predicated region
      $region9: #{tpu_custom_call.1} parent=5 // pred_check
        _
      $region10: #{tpu_custom_call.1} parent=5 // pred_check_branch
        %267 = sbr.rel (%p264) target = $region12
      $region11: #{tpu_custom_call.1} parent=5 // pred_region
        %s268 = ssub.s32 %s18, 1
        // Predicated region
        $region13: #{tpu_custom_call.1} parent=11 // pred_check
          %p269 = pneg %p79
        $region14: #{tpu_custom_call.1} parent=11 // pred_check_branch
          %271 = sbr.rel (%p269) target = $region16
        $region15: #{tpu_custom_call.1} parent=11 // pred_region
          _
        $region16: #{tpu_custom_call.1} parent=11 // pred_fallthru
          _
        // Predicated region
        $region17: #{tpu_custom_call.1} parent=11 // pred_check
          %p272 = pneg %p100
        $region18: #{tpu_custom_call.1} parent=11 // pred_check_branch
          %274 = sbr.rel (%p272) target = $region20
        $region19: #{tpu_custom_call.1} parent=11 // pred_region
          _
        $region20: #{tpu_custom_call.1} parent=11 // pred_fallthru
          _
        // Predicated region
        $region21: #{tpu_custom_call.1} parent=11 // pred_check
          %p275 = pneg %p121
        $region22: #{tpu_custom_call.1} parent=11 // pred_check_branch
          %277 = sbr.rel (%p275) target = $region24
        $region23: #{tpu_custom_call.1} parent=11 // pred_region
          _
        $region24: #{tpu_custom_call.1} parent=11 // pred_fallthru
          _
        // Predicated region
        $region25: #{tpu_custom_call.1} parent=11 // pred_check
          %p278 = pneg %p142
        $region26: #{tpu_custom_call.1} parent=11 // pred_check_branch
          %280 = sbr.rel (%p278) target = $region28
        $region27: #{tpu_custom_call.1} parent=11 // pred_region
          _
        $region28: #{tpu_custom_call.1} parent=11 // pred_fallthru
          _
        // Predicated region
        $region29: #{tpu_custom_call.1} parent=11 // pred_check
          %p281 = pneg %p163
        $region30: #{tpu_custom_call.1} parent=11 // pred_check_branch
          %283 = sbr.rel (%p281) target = $region32
        $region31: #{tpu_custom_call.1} parent=11 // pred_region
          _
        $region32: #{tpu_custom_call.1} parent=11 // pred_fallthru
          _
        // Predicated region
        $region33: #{tpu_custom_call.1} parent=11 // pred_check
          %p284 = pneg %p184
        $region34: #{tpu_custom_call.1} parent=11 // pred_check_branch
          %286 = sbr.rel (%p284) target = $region36
        $region35: #{tpu_custom_call.1} parent=11 // pred_region
          _
        $region36: #{tpu_custom_call.1} parent=11 // pred_fallthru
          _
        // Predicated region
        $region37: #{tpu_custom_call.1} parent=11 // pred_check
          %p287 = pneg %p205
        $region38: #{tpu_custom_call.1} parent=11 // pred_check_branch
          %289 = sbr.rel (%p287) target = $region40
        $region39: #{tpu_custom_call.1} parent=11 // pred_region
          _
        $region40: #{tpu_custom_call.1} parent=11 // pred_fallthru
          _
        // Predicated region
        $region41: #{tpu_custom_call.1} parent=11 // pred_check
          %p290 = pneg %p226
        $region42: #{tpu_custom_call.1} parent=11 // pred_check_branch
          %292 = sbr.rel (%p290) target = $region44
        $region43: #{tpu_custom_call.1} parent=11 // pred_region
          _
        $region44: #{tpu_custom_call.1} parent=11 // pred_fallthru
          _
      $region12: #{tpu_custom_call.1} parent=5 // pred_fallthru
        _
      %p293 = scmp.lt.s32.totalorder %s18, 2
      // Predicated region
      $region45: #{tpu_custom_call.1} parent=5 // pred_check
        %p294 = pneg %p293
      $region46: #{tpu_custom_call.1} parent=5 // pred_check_branch
        %296 = sbr.rel (%p294) target = $region48
      $region47: #{tpu_custom_call.1} parent=5 // pred_region
        // Predicated region
        $region49: #{tpu_custom_call.1} parent=47 // pred_check
          %p297 = pneg %p52
        $region50: #{tpu_custom_call.1} parent=47 // pred_check_branch
          %299 = sbr.rel (%p297) target = $region52
        $region51: #{tpu_custom_call.1} parent=47 // pred_region
          %s300 = smul.u32 2, %s26
          %p301 = scmp.lt.s32.totalorder %s25, 1
          %s302 = scalar_select %p301, %s25, 1
          %p303 = scmp.lt.s32.totalorder %s300, 1
          %s304 = scalar_select %p303, %s300, 1
          %s305 = smul.addr %s302, 2
          %s306 = sadd.s32 %s304, %s305
          %s307 = smul.addr %s306, 4
          %s308 = scalar_lea.vmem %s0, %s307
          %s309 = smul.u32 2, %s26
        $region52: #{tpu_custom_call.1} parent=47 // pred_fallthru
          _
      $region48: #{tpu_custom_call.1} parent=5 // pred_fallthru
        _
      %p310 = scmp.le.s32.totalorder 1, %s18
      %p311 = scmp.lt.s32.totalorder %s18, 3
      %p312 = pnand %p310, %p311
      %p313 = pneg %p312
      // Predicated region
      $region53: #{tpu_custom_call.1} parent=5 // pred_check
        _
      $region54: #{tpu_custom_call.1} parent=5 // pred_check_branch
        %315 = sbr.rel (%p312) target = $region56
      $region55: #{tpu_custom_call.1} parent=5 // pred_region
        %s316 = ssub.s32 %s18, 1
        %s317 = smul.u32 2, %s28
        %p318 = scmp.lt.s32.totalorder %s27, 1
        %s319 = scalar_select %p318, %s27, 1
        %p320 = scmp.lt.s32.totalorder %s317, 1
        %s321 = scalar_select %p320, %s317, 1
        %s322 = smul.addr %s319, 2
        %s323 = sadd.s32 %s321, %s322
        %s324 = smul.addr %s323, 4
        %s325 = scalar_lea.vmem %s0, %s324
        %p326 = pneg %p58
        %p327 = pneg %p55
        %p328 = pneg %p79
        %p329 = pneg %p76
        %p330 = pneg %p100
        %p331 = pneg %p97
        %p332 = pneg %p121
        %p333 = pneg %p118
        %p334 = pneg %p142
        %p335 = pneg %p139
        %p336 = pneg %p163
        %p337 = pneg %p160
        %p338 = pneg %p184
        %p339 = pneg %p181
        %p340 = pneg %p205
        %p341 = pneg %p202
        %p342 = pneg %p226
        %p343 = pneg %p223
        %p344 = pneg %p254
        %p345 = pneg %p251
        %s346 = sand.u32 %s241, 1
        %s347 = scalar_lea.sflag [#allocation3], %s346
        %s348 = sand.u32 %s241, 1
        %s349 = smul.addr %s348, 8
        %s350 = scalar_lea.vmem [#allocation2], %s349
        %s351 = smul.u32 2, %s28
        %p352 = scmp.lt.s32.totalorder %s27, 1
        %s353 = scalar_select %p352, %s27, 1
        %p354 = scmp.lt.s32.totalorder %s351, 1
        %s355 = scalar_select %p354, %s351, 1
        %s356 = smul.addr %s353, 2
        %s357 = sadd.s32 %s355, %s356
        %s358 = smul.addr %s357, 4
        %s359 = scalar_lea.vmem %s0, %s358
        %s360 = smul.u32 2, %s28
        %s361 = smul.u32 2, %s28
        %v363 = vld [vmem:[%s359] sm:$0xff]
        %v365 = vcombine.high %v363, %v363
        %v367 = vpack.c.bf16 %v363, %v363
        %v368 = vpack.c.bf16 %v365, %v365
        %v369 = vld [vmem:[%s1] sm:$0xff]
        %v370 = vld [vmem:[%s1 + $0x8] sm:$0xff]
        %v371 = vld [vmem:[%s1 + $0x10] sm:$0xff]
        %v372 = vld [vmem:[%s1 + $0x18] sm:$0xff]
        %v373 = vpack.c.bf16 %v370, %v369
        %v374 = vpack.c.bf16 %v372, %v371
        %v375 = vld [vmem:[%s2] sm:$0xff]
        %v376 = vld [vmem:[%s2 + $0x8] sm:$0xff]
        %v377 = vld [vmem:[%s2 + $0x10] sm:$0xff]
        %v378 = vld [vmem:[%s2 + $0x18] sm:$0xff]
        %380 = vset.pattern.permute.xlu0 0
        %381 = vperm.xlu0 %380, %v375
        %v382 = vpop.permute.xlu0 %381
        %385 = vset.pattern.permute.xlu0 0
        %386 = vperm.xlu0 %385, %v376
        %v387 = vpop.permute.xlu0 %386
        %390 = vset.pattern.permute.xlu0 0
        %391 = vperm.xlu0 %390, %v377
        %v392 = vpop.permute.xlu0 %391
        %395 = vset.pattern.permute.xlu0 0
        %396 = vperm.xlu0 %395, %v378
        %v397 = vpop.permute.xlu0 %396
        %vm399 = vcmask 31744
        %v401 = vsel %vm399, %v373, 0
        %v404 = vsel %vm399, %v374, 0
        %vm406 = vcmask 1041408
        %v408 = vsel %vm406, %v367, 0
        %v411 = vsel %vm406, %v368, 0
        %413 = vmatprep.subr.bf16.mxu0 %v411
        %414 = vmatpush1.bf16.msra.mxu0 %v408
        %415 = vmatprep.subr.bf16.mxu0 0
        %416 = vmatpush1.bf16.msra.mxu0 0
        %417 = vmatprep.subr.bf16.mxu0 0
        %418 = vmatpush1.bf16.msra.mxu0 0
        %419 = vmatprep.subr.bf16.mxu0 0
        %420 = vmatpush1.bf16.msra.mxu0 0
        %421 = vmatprep.subr.bf16.mxu0 0
        %422 = vmatpush1.bf16.msra.mxu0 0
        %423 = vmatprep.subr.bf16.mxu0 0
        %424 = vmatpush1.bf16.msra.mxu0 0
        %425 = vmatprep.subr.bf16.mxu0 0
        %426 = vmatpush1.bf16.msra.mxu0 0
        %427 = vmatprep.subr.bf16.mxu0 0
        %428 = vmatpush1.bf16.msra.mxu0 0
        %429 = vmatprep.subr.bf16.mxu0 0
        %430 = vmatpush1.bf16.msra.mxu0 0
        %431 = vmatprep.subr.bf16.mxu0 0
        %432 = vmatpush1.bf16.msra.mxu0 0
        %433 = vmatprep.subr.bf16.mxu0 0
        %434 = vmatpush1.bf16.msra.mxu0 0
        %435 = vmatprep.subr.bf16.mxu0 0
        %436 = vmatpush1.bf16.msra.mxu0 0
        %437 = vmatprep.subr.bf16.mxu0 0
        %438 = vmatpush1.bf16.msra.mxu0 0
        %439 = vmatprep.subr.bf16.mxu0 0
        %440 = vmatpush1.bf16.msra.mxu0 0
        %441 = vmatprep.subr.bf16.mxu0 0
        %442 = vmatpush1.bf16.msra.mxu0 0
        %443 = vmatprep.subr.bf16.mxu0 0
        %444 = vmatpush1.bf16.msra.mxu0 0
        %445 = vmatprep.mubr.bf16.mxu0 0
        %446 = vmatmul.mubr.bf16.gmra.mrb[0].mxu0 %v401
        %v447 = vpop.f32.mrb[0].mxu0
        %v448 = vadd.f32 %v382, %v447
        %v449 = vpop.f32.mrb[0].mxu0
        %v450 = vadd.f32 %v382, %v449
        %v451 = vpop.f32.mrb[0].mxu0
        %v452 = vadd.f32 %v387, %v451
        %v453 = vpop.f32.mrb[0].mxu0
        %v454 = vadd.f32 %v387, %v453
        %455 = vmatprep.mubr.bf16.mxu0 0
        %456 = vmatmul.mubr.bf16.gmra.mrb[0].mxu0 %v404
        %v457 = vpop.f32.mrb[0].mxu0
        %v458 = vadd.f32 %v392, %v457
        %v459 = vpop.f32.mrb[0].mxu0
        %v460 = vadd.f32 %v392, %v459
        %v461 = vpop.f32.mrb[0].mxu0
        %v462 = vadd.f32 %v397, %v461
        %v463 = vpop.f32.mrb[0].mxu0
        %v464 = vadd.f32 %v397, %v463
        %465 = vdwg.mxu0
        %v466 = vpack.c.bf16 %v452, %v448
        %v467 = vpack.c.bf16 %v454, %v450
        %v468 = vpack.c.bf16 %v462, %v458
        %v469 = vpack.c.bf16 %v464, %v460
        %v470 = vmax.bf16 %v466, 0
        %v471 = vmax.bf16 %v467, 0
        %v472 = vmax.bf16 %v468, 0
        %v473 = vmax.bf16 %v469, 0
        %v474 = vld [vmem:[%s3] sm:$0xff]
        %v475 = vld [vmem:[%s3 + $0x8] sm:$0xff]
        %v476 = vld [vmem:[%s3 + $0x10] sm:$0xff]
        %v477 = vld [vmem:[%s3 + $0x18] sm:$0xff]
        %v478 = vpack.c.bf16 %v475, %v474
        %v479 = vpack.c.bf16 %v477, %v476
        %v480 = vld [vmem:[%s4] sm:$0xff]
        %v481 = vld [vmem:[%s4 + $0x8] sm:$0xff]
        %v482 = vld [vmem:[%s4 + $0x10] sm:$0xff]
        %v483 = vld [vmem:[%s4 + $0x18] sm:$0xff]
        %485 = vset.pattern.permute.xlu0 0
        %486 = vperm.xlu0 %485, %v480
        %v487 = vpop.permute.xlu0 %486
        %490 = vset.pattern.permute.xlu0 0
        %491 = vperm.xlu0 %490, %v481
        %v492 = vpop.permute.xlu0 %491
        %495 = vset.pattern.permute.xlu0 0
        %496 = vperm.xlu0 %495, %v482
        %v497 = vpop.permute.xlu0 %496
        %500 = vset.pattern.permute.xlu0 0
        %501 = vperm.xlu0 %500, %v483
        %v502 = vpop.permute.xlu0 %501
        %vm504 = vcmask 261120
        %v506 = vsel %vm504, %v478, 0
        %v509 = vsel %vm504, %v479, 0
        %511 = vmatprep.subr.bf16.mxu0 %v471
        %512 = vmatpush1.bf16.msra.mxu0 %v470
        %513 = vmatprep.subr.bf16.mxu0 %v473
        %514 = vmatpush1.bf16.msra.mxu0 %v472
        %515 = vmatprep.subr.bf16.mxu0 0
        %516 = vmatpush1.bf16.msra.mxu0 0
        %517 = vmatprep.subr.bf16.mxu0 0
        %518 = vmatpush1.bf16.msra.mxu0 0
        %519 = vmatprep.subr.bf16.mxu0 0
        %520 = vmatpush1.bf16.msra.mxu0 0
        %521 = vmatprep.subr.bf16.mxu0 0
        %522 = vmatpush1.bf16.msra.mxu0 0
        %523 = vmatprep.subr.bf16.mxu0 0
        %524 = vmatpush1.bf16.msra.mxu0 0
        %525 = vmatprep.subr.bf16.mxu0 0
        %526 = vmatpush1.bf16.msra.mxu0 0
        %527 = vmatprep.subr.bf16.mxu0 0
        %528 = vmatpush1.bf16.msra.mxu0 0
        %529 = vmatprep.subr.bf16.mxu0 0
        %530 = vmatpush1.bf16.msra.mxu0 0
        %531 = vmatprep.subr.bf16.mxu0 0
        %532 = vmatpush1.bf16.msra.mxu0 0
        %533 = vmatprep.subr.bf16.mxu0 0
        %534 = vmatpush1.bf16.msra.mxu0 0
        %535 = vmatprep.subr.bf16.mxu0 0
        %536 = vmatpush1.bf16.msra.mxu0 0
        %537 = vmatprep.subr.bf16.mxu0 0
        %538 = vmatpush1.bf16.msra.mxu0 0
        %539 = vmatprep.subr.bf16.mxu0 0
        %540 = vmatpush1.bf16.msra.mxu0 0
        %541 = vmatprep.subr.bf16.mxu0 0
        %542 = vmatpush1.bf16.msra.mxu0 0
        %543 = vmatprep.mubr.bf16.mxu0 0
        %544 = vmatmul.mubr.bf16.gmra.mrb[0].mxu0 %v506
        %v545 = vpop.f32.mrb[0].mxu0
        %v546 = vadd.f32 %v487, %v545
        %v547 = vpop.f32.mrb[0].mxu0
        %v548 = vadd.f32 %v487, %v547
        %v549 = vpop.f32.mrb[0].mxu0
        %v550 = vadd.f32 %v492, %v549
        %v551 = vpop.f32.mrb[0].mxu0
        %v552 = vadd.f32 %v492, %v551
        %553 = vmatprep.mubr.bf16.mxu0 0
        %554 = vmatmul.mubr.bf16.gmra.mrb[0].mxu0 %v509
        %v555 = vpop.f32.mrb[0].mxu0
        %v556 = vadd.f32 %v497, %v555
        %v557 = vpop.f32.mrb[0].mxu0
        %v558 = vadd.f32 %v497, %v557
        %v559 = vpop.f32.mrb[0].mxu0
        %v560 = vadd.f32 %v502, %v559
        %v561 = vpop.f32.mrb[0].mxu0
        %v562 = vadd.f32 %v502, %v561
        %563 = vdwg.mxu0
        %v564 = vpack.c.bf16 %v550, %v546
        %v565 = vpack.c.bf16 %v552, %v548
        %v566 = vpack.c.bf16 %v560, %v556
        %v567 = vpack.c.bf16 %v562, %v558
        %v568 = vmax.bf16 %v564, 0
        %v569 = vmax.bf16 %v565, 0
        %v570 = vmax.bf16 %v566, 0
        %v571 = vmax.bf16 %v567, 0
        %v572 = vld [vmem:[%s5] sm:$0xff]
        %v573 = vld [vmem:[%s5 + $0x8] sm:$0xff]
        %v574 = vld [vmem:[%s5 + $0x10] sm:$0xff]
        %v575 = vld [vmem:[%s5 + $0x18] sm:$0xff]
        %v576 = vpack.c.bf16 %v573, %v572
        %v577 = vpack.c.bf16 %v575, %v574
        %v578 = vld [vmem:[%s6] sm:$0xff]
        %v579 = vld [vmem:[%s6 + $0x8] sm:$0xff]
        %v580 = vld [vmem:[%s6 + $0x10] sm:$0xff]
        %v581 = vld [vmem:[%s6 + $0x18] sm:$0xff]
        %583 = vset.pattern.permute.xlu0 0
        %584 = vperm.xlu0 %583, %v578
        %v585 = vpop.permute.xlu0 %584
        %588 = vset.pattern.permute.xlu0 0
        %589 = vperm.xlu0 %588, %v579
        %v590 = vpop.permute.xlu0 %589
        %593 = vset.pattern.permute.xlu0 0
        %594 = vperm.xlu0 %593, %v580
        %v595 = vpop.permute.xlu0 %594
        %598 = vset.pattern.permute.xlu0 0
        %599 = vperm.xlu0 %598, %v581
        %v600 = vpop.permute.xlu0 %599
        %v603 = vsel %vm504, %v576, 0
        %v606 = vsel %vm504, %v577, 0
        %608 = vmatprep.subr.bf16.mxu0 %v569
        %609 = vmatpush1.bf16.msra.mxu0 %v568
        %610 = vmatprep.subr.bf16.mxu0 %v571
        %611 = vmatpush1.bf16.msra.mxu0 %v570
        %612 = vmatprep.subr.bf16.mxu0 0
        %613 = vmatpush1.bf16.msra.mxu0 0
        %614 = vmatprep.subr.bf16.mxu0 0
        %615 = vmatpush1.bf16.msra.mxu0 0
        %616 = vmatprep.subr.bf16.mxu0 0
        %617 = vmatpush1.bf16.msra.mxu0 0
        %618 = vmatprep.subr.bf16.mxu0 0
        %619 = vmatpush1.bf16.msra.mxu0 0
        %620 = vmatprep.subr.bf16.mxu0 0
        %621 = vmatpush1.bf16.msra.mxu0 0
        %622 = vmatprep.subr.bf16.mxu0 0
        %623 = vmatpush1.bf16.msra.mxu0 0
        %624 = vmatprep.subr.bf16.mxu0 0
        %625 = vmatpush1.bf16.msra.mxu0 0
        %626 = vmatprep.subr.bf16.mxu0 0
        %627 = vmatpush1.bf16.msra.mxu0 0
        %628 = vmatprep.subr.bf16.mxu0 0
        %629 = vmatpush1.bf16.msra.mxu0 0
        %630 = vmatprep.subr.bf16.mxu0 0
        %631 = vmatpush1.bf16.msra.mxu0 0
        %632 = vmatprep.subr.bf16.mxu0 0
        %633 = vmatpush1.bf16.msra.mxu0 0
        %634 = vmatprep.subr.bf16.mxu0 0
        %635 = vmatpush1.bf16.msra.mxu0 0
        %636 = vmatprep.subr.bf16.mxu0 0
        %637 = vmatpush1.bf16.msra.mxu0 0
        %638 = vmatprep.subr.bf16.mxu0 0
        %639 = vmatpush1.bf16.msra.mxu0 0
        %640 = vmatprep.mubr.bf16.mxu0 0
        %641 = vmatmul.mubr.bf16.gmra.mrb[0].mxu0 %v603
        %v642 = vpop.f32.mrb[0].mxu0
        %v643 = vadd.f32 %v585, %v642
        %v644 = vpop.f32.mrb[0].mxu0
        %v645 = vadd.f32 %v585, %v644
        %v646 = vpop.f32.mrb[0].mxu0
        %v647 = vadd.f32 %v590, %v646
        %v648 = vpop.f32.mrb[0].mxu0
        %v649 = vadd.f32 %v590, %v648
        %650 = vmatprep.mubr.bf16.mxu0 0
        %651 = vmatmul.mubr.bf16.gmra.mrb[0].mxu0 %v606
        %v652 = vpop.f32.mrb[0].mxu0
        %v653 = vadd.f32 %v595, %v652
        %v654 = vpop.f32.mrb[0].mxu0
        %v655 = vadd.f32 %v595, %v654
        %v656 = vpop.f32.mrb[0].mxu0
        %v657 = vadd.f32 %v600, %v656
        %v658 = vpop.f32.mrb[0].mxu0
        %v659 = vadd.f32 %v600, %v658
        %660 = vdwg.mxu0
        %v661 = vpack.c.bf16 %v647, %v643
        %v662 = vpack.c.bf16 %v649, %v645
        %v663 = vpack.c.bf16 %v657, %v653
        %v664 = vpack.c.bf16 %v659, %v655
        %v665 = vmax.bf16 %v661, 0
        %v666 = vmax.bf16 %v662, 0
        %v667 = vmax.bf16 %v663, 0
        %v668 = vmax.bf16 %v664, 0
        %v669 = vld [vmem:[%s7] sm:$0xf]
        %v670 = vpack.c.bf16 %v669, %v669
        %v671 = vld [vmem:[%s8] sm:$0xf]
        %673 = vset.pattern.permute.xlu0 0
        %674 = vperm.xlu0 %673, %v671
        %v675 = vpop.permute.xlu0 %674
        %v678 = vsel %vm504, %v670, 0
        %680 = vmatprep.subr.bf16.mxu0 %v666
        %681 = vmatpush1.bf16.msra.mxu0 %v665
        %682 = vmatprep.subr.bf16.mxu0 %v668
        %683 = vmatpush1.bf16.msra.mxu0 %v667
        %684 = vmatprep.subr.bf16.mxu0 0
        %685 = vmatpush1.bf16.msra.mxu0 0
        %686 = vmatprep.subr.bf16.mxu0 0
        %687 = vmatpush1.bf16.msra.mxu0 0
        %688 = vmatprep.subr.bf16.mxu0 0
        %689 = vmatpush1.bf16.msra.mxu0 0
        %690 = vmatprep.subr.bf16.mxu0 0
        %691 = vmatpush1.bf16.msra.mxu0 0
        %692 = vmatprep.subr.bf16.mxu0 0
        %693 = vmatpush1.bf16.msra.mxu0 0
        %694 = vmatprep.subr.bf16.mxu0 0
        %695 = vmatpush1.bf16.msra.mxu0 0
        %696 = vmatprep.subr.bf16.mxu0 0
        %697 = vmatpush1.bf16.msra.mxu0 0
        %698 = vmatprep.subr.bf16.mxu0 0
        %699 = vmatpush1.bf16.msra.mxu0 0
        %700 = vmatprep.subr.bf16.mxu0 0
        %701 = vmatpush1.bf16.msra.mxu0 0
        %702 = vmatprep.subr.bf16.mxu0 0
        %703 = vmatpush1.bf16.msra.mxu0 0
        %704 = vmatprep.subr.bf16.mxu0 0
        %705 = vmatpush1.bf16.msra.mxu0 0
        %706 = vmatprep.subr.bf16.mxu0 0
        %707 = vmatpush1.bf16.msra.mxu0 0
        %708 = vmatprep.subr.bf16.mxu0 0
        %709 = vmatpush1.bf16.msra.mxu0 0
        %710 = vmatprep.subr.bf16.mxu0 0
        %711 = vmatpush1.bf16.msra.mxu0 0
        %712 = vmatprep.mubr.bf16.mxu0 0
        %713 = vmatmul.mubr.bf16.gmra.mrb[0].mxu0 %v678
        %v714 = vpop.f32.mrb[0].mxu0
        %v715 = vadd.f32 %v675, %v714
        %v716 = vpop.f32.mrb[0].mxu0
        %v717 = vadd.f32 %v675, %v716
        %v718 = vpop.f32.mrb[0].mxu0
        %v719 = vpop.f32.mrb[0].mxu0
        %720 = vdwg.mxu0
        %v723 = vcombine.low %v715, %v717
        %725 = vst [vmem:[%s350] sm:$0xff] %v723
        %s726 = sand.u32 %s241, 1
        %s727 = scalar_lea.sflag [#allocation3], %s726
        %s728 = sand.u32 %s241, 1
        %s729 = smul.addr %s728, 8
        %s730 = scalar_lea.vmem [#allocation2], %s729
        // Predicated region
        $region57: #{tpu_custom_call.1} parent=55 // pred_check
          %p731 = pneg %p251
        $region58: #{tpu_custom_call.1} parent=55 // pred_check_branch
          %733 = sbr.rel (%p731) target = $region60
        $region59: #{tpu_custom_call.1} parent=55 // pred_region
          %s734 = smul.u32 2, %s28
          %s736 = ssub.s32 128, 128
          %737 = vsyncadd %s727, %s736
          %s738 = smul.addr %s27, 2
          %s739 = sadd.s32 %s734, %s738
          %s740 = smul.addr %s739, 64
          %s741 = scalar_lea.hbm %s9, %s740
          %s743 = sshll.u32 %s730, 4
          %s744 = int_to_ptr.vmem [resolvable:$true] %s743
          %746 = dma.vmem_to_hbm [thread:$0]  %s744, 128, %s741, %s727
        $region60: #{tpu_custom_call.1} parent=55 // pred_fallthru
          _
      $region56: #{tpu_custom_call.1} parent=5 // pred_fallthru
        _
      %p747 = scmp.le.s32.totalorder 2, %s18
      // Predicated region
      $region61: #{tpu_custom_call.1} parent=5 // pred_check
        %p748 = pneg %p747
      $region62: #{tpu_custom_call.1} parent=5 // pred_check_branch
        %750 = sbr.rel (%p748) target = $region64
      $region63: #{tpu_custom_call.1} parent=5 // pred_region
        %s751 = ssub.s32 %s18, 2
        // Predicated region
        $region65: #{tpu_custom_call.1} parent=63 // pred_check
          %p752 = pneg %p257
        $region66: #{tpu_custom_call.1} parent=63 // pred_check_branch
          %754 = sbr.rel (%p752) target = $region68
        $region67: #{tpu_custom_call.1} parent=63 // pred_region
          %s755 = sand.u32 %s242, 1
          %s756 = scalar_lea.sflag [#allocation3], %s755
          %s757 = sand.u32 %s242, 1
          %s758 = smul.addr %s757, 8
          %s759 = scalar_lea.vmem [#allocation2], %s758
          %760 = dma.done %s756, 128
        $region68: #{tpu_custom_call.1} parent=63 // pred_fallthru
          _
      $region64: #{tpu_custom_call.1} parent=5 // pred_fallthru
        _
    $region6: #{tpu_custom_call.1} parent=1 // loop_footer
      %s22 = sadd.s32 1, %s18
    $region7: #{tpu_custom_call.1} parent=1 // loop_footer_branch
      %17 = sbr.rel target = $region3
    $region8: #{tpu_custom_call.1} parent=1 // loop_exit
      _
    %761 = vsyncpa [#allocation3], 1
    %s762 = scalar_lea.sflag [#allocation3], 1
    %763 = vsyncpa %s762, 1

</llo_original>
